<compile_context>
chip_gen: v5e
topology: v5e:2x2
jax: 0.10.0
libtpu: 0.0.40
codegen_flags: <defaults>
</compile_context>

<pallas_src>
import jax
import jax.numpy as jnp
from jax.experimental import pallas as pl
from jax.experimental.pallas import tpu as pltpu

B = 32            # batch of (x1, x2) pairs  (multiple of 16 for bf16 sublane packing)
D_IN = 32         # input feature dim
HID = 64          # hidden / embedding dim
D_OUT = 16        # logical rho output dim
D_OUT_PAD = 128   # rho output padded to a full 128-lane vreg width

LANE_IN = 2 * D_IN        # 64  : x1|x2 lane-packed input width
LANE_HID = 2 * HID        # 128 : e1|e2 lane-packed hidden width
WI_END = LANE_IN          # rows [0, 64)   of the weight slab -> block-diag Wi
WP_END = WI_END + LANE_HID  # rows [64, 192) -> block-diag Wp
W_ROWS = WP_END + LANE_HID  # rows [192, 320) -> stacked Wr ; total 320 rows


def productnet_kernel(xs_ref, w_ref, b_ref, emb_ref, out_ref):
    # Static views into the packed parameter slabs (slice starts are multiples
    # of the bf16 (16,128) tiling -> no layout copies).
    wi = w_ref[0:WI_END, :]          # (64, 128)  blockdiag(Wi, Wi), bf16
    wp = w_ref[WI_END:WP_END, :]     # (128, 128) blockdiag(Wp, Wp), bf16
    wr = w_ref[WP_END:W_ROWS, :]     # (128, 128) [Wr_pad ; Wr_pad], bf16
    bi = b_ref[0:1, :]               # (1, 128)   [bi | bi], f32
    bp = b_ref[1:2, :]               # (1, 128)   [bp | bp], f32
    br = b_ref[2:3, :]               # (1, 128)   br zero-padded, f32

    xs = xs_ref[...]                 # (B, 64) bf16, lanes = [x1 | x2]

    # initial: bf16 MXU, f32 accumulate, f32 bias + ReLU.
    h = jnp.dot(xs, wi, preferred_element_type=jnp.float32) + bi
    h = jnp.maximum(h, 0.0).astype(jnp.bfloat16)          # (B, 128) = [h1 | h2]

    # phi: same pattern; keep the f32 result for the embedding store.
    e = jnp.dot(h, wp, preferred_element_type=jnp.float32) + bp
    e = jnp.maximum(e, 0.0)                               # (B, 128) f32 = [e1 | e2]

    # Lane-dense, full-width embedding store (no concat needed).
    emb_ref[...] = e.astype(emb_ref.dtype)

    # rho on the lane-packed slab: [e1|e2] @ [Wr;Wr] = e1@Wr + e2@Wr  (+ br once).
    s = jnp.dot(e.astype(jnp.bfloat16), wr, preferred_element_type=jnp.float32) + br
    out_ref[...] = s.astype(out_ref.dtype)                # (B, 128), lanes >= D_OUT are 0+br_pad=0


def product_net(x1, x2, packed_params):
    """x1, x2: (B, D_IN) bf16.  Returns (out, embd1, embd2) like the PyTorch module."""
    w_all, b_all = packed_params
    bsz = x1.shape[0]

    # Lane-pack the pair once on the host side (in a hot loop the caller could
    # keep its inputs pre-packed and skip this op entirely).
    xs = jnp.concatenate([x1, x2], axis=1)                # (B, 2*D_IN) bf16

    grid_spec = pltpu.PrefetchScalarGridSpec(
        num_scalar_prefetch=0,
        grid=(1,),                                        # single step: overhead-dominated size
        in_specs=[
            pl.BlockSpec((bsz, LANE_IN), lambda i: (0, 0)),    # xs
            pl.BlockSpec((W_ROWS, LANE_HID), lambda i: (0, 0)),  # packed weights (1 DMA)
            pl.BlockSpec((3, LANE_HID), lambda i: (0, 0)),       # packed biases  (1 DMA)
        ],
        out_specs=[
            pl.BlockSpec((bsz, LANE_HID), lambda i: (0, 0)),     # packed (e1|e2), f32
            pl.BlockSpec((bsz, D_OUT_PAD), lambda i: (0, 0)),    # padded out, f32
        ],
    )

    emb_packed, out_pad = pl.pallas_call(
        productnet_kernel,
        out_shape=(
            jax.ShapeDtypeStruct((bsz, LANE_HID), jnp.float32),
            jax.ShapeDtypeStruct((bsz, D_OUT_PAD), jnp.float32),
        ),
        grid_spec=grid_spec,
        compiler_params=pltpu.CompilerParams(
            dimension_semantics=("arbitrary",)),
    )(xs, w_all, b_all)

    # Interface fidelity with the PyTorch module; downstream consumers that can
    # take the packed layout should use emb_packed / out_pad directly.
    out = out_pad[:, :D_OUT]
    e1 = emb_packed[:, :HID]
    e2 = emb_packed[:, HID:]
    return out, e1, e2


def init_params(key):
    """Logical parameters, stored (in, out) — transpose of PyTorch's (out, in)."""
    k = jax.random.split(key, 6)
    wi = (jax.random.normal(k[0], (D_IN, HID), jnp.float32) * 0.1).astype(jnp.bfloat16)
    bi = jax.random.normal(k[1], (1, HID), jnp.float32) * 0.1
    wp = (jax.random.normal(k[2], (HID, HID), jnp.float32) * 0.1).astype(jnp.bfloat16)
    bp = jax.random.normal(k[3], (1, HID), jnp.float32) * 0.1
    wr = (jax.random.normal(k[4], (HID, D_OUT), jnp.float32) * 0.1).astype(jnp.bfloat16)
    br = jax.random.normal(k[5], (1, D_OUT), jnp.float32) * 0.1
    return (wi, bi, wp, bp, wr, br)


def pack_params(params):
    """One-time host-side packing: block-diag / stacked weights into 2 slabs."""
    wi, bi, wp, bp, wr, br = params
    z_ih = jnp.zeros((D_IN, HID), jnp.bfloat16)
    z_hh = jnp.zeros((HID, HID), jnp.bfloat16)
    wi_blk = jnp.block([[wi, z_ih], [z_ih, wi]])                       # (64, 128)
    wp_blk = jnp.block([[wp, z_hh], [z_hh, wp]])                       # (128, 128)
    wr_pad = jnp.zeros((HID, D_OUT_PAD), jnp.bfloat16).at[:, :D_OUT].set(wr)
    wr_stk = jnp.concatenate([wr_pad, wr_pad], axis=0)                 # (128, 128)
    w_all = jnp.concatenate([wi_blk, wp_blk, wr_stk], axis=0)          # (320, 128) bf16

    bi_dup = jnp.concatenate([bi, bi], axis=1)                         # (1, 128)
    bp_dup = jnp.concatenate([bp, bp], axis=1)                         # (1, 128)
    br_pad = jnp.zeros((1, D_OUT_PAD), jnp.float32).at[:, :D_OUT].set(br)
    b_all = jnp.concatenate([bi_dup, bp_dup, br_pad], axis=0)          # (3, 128) f32
    return (w_all, b_all)


def product_net_ref(x1, x2, params):
    """Pure-JAX reference mirroring the PyTorch module structure (rho on e1+e2)."""
    wi, bi, wp, bp, wr, br = params

    def initial(x):
        return jnp.maximum(jnp.dot(x, wi, preferred_element_type=jnp.float32) + bi, 0.0)

    def phi(h):
        return jnp.maximum(
            jnp.dot(h.astype(jnp.bfloat16), wp, preferred_element_type=jnp.float32) + bp, 0.0)

    def rho(h):
        return jnp.dot(h.astype(jnp.bfloat16), wr, preferred_element_type=jnp.float32) + br

    e1 = phi(initial(x1))
    e2 = phi(initial(x2))
    out = rho(e1 + e2)
    return out, e1, e2


if __name__ == "__main__":
    key = jax.random.PRNGKey(0)
    kx1, kx2, kp = jax.random.split(key, 3)
    x1 = jax.random.normal(kx1, (B, D_IN), jnp.float32).astype(jnp.bfloat16)
    x2 = jax.random.normal(kx2, (B, D_IN), jnp.float32).astype(jnp.bfloat16)

    params = init_params(kp)
    packed = pack_params(params)

    out, e1, e2 = jax.block_until_ready(product_net(x1, x2, packed))

    ref_out, ref_e1, ref_e2 = product_net_ref(x1, x2, params)
    assert jnp.allclose(out, ref_out, rtol=2e-2, atol=1e-2), "out mismatch"
    assert jnp.allclose(e1, ref_e1, rtol=2e-2, atol=1e-2), "embd1 mismatch"
    assert jnp.allclose(e2, ref_e2, rtol=2e-2, atol=1e-2), "embd2 mismatch"

    print("KERNEL_OK")
</pallas_src>

<mosaic_0001>
module attributes {stable_mosaic.version = 11 : i64} {
  func.func @productnet_kernel(%arg0: i32, %arg1: memref<32x64xbf16, #tpu.memory_space<vmem>>, %arg2: memref<320x128xbf16, #tpu.memory_space<vmem>>, %arg3: memref<3x128xf32, #tpu.memory_space<vmem>>, %arg4: memref<32x128xf32, #tpu.memory_space<vmem>>, %arg5: memref<32x128xf32, #tpu.memory_space<vmem>>) attributes {dimension_semantics = [#tpu.dimension_semantics<arbitrary>], iteration_bounds = array<i64: 1>, scalar_prefetch = 0 : i64, scratch_operands = 0 : i64, tpu.core_type = #tpu.core_type<tc>, window_params = [{pipeline_mode = #tpu.pipeline_mode<synchronous>, transform_indices = @transform_0, window_bounds = array<i64: 32, 64>}, {pipeline_mode = #tpu.pipeline_mode<synchronous>, transform_indices = @transform_1, window_bounds = array<i64: 320, 128>}, {pipeline_mode = #tpu.pipeline_mode<synchronous>, transform_indices = @transform_2, window_bounds = array<i64: 3, 128>}, {pipeline_mode = #tpu.pipeline_mode<synchronous>, transform_indices = @transform_3, window_bounds = array<i64: 32, 128>}, {pipeline_mode = #tpu.pipeline_mode<synchronous>, transform_indices = @transform_4, window_bounds = array<i64: 32, 128>}]} {
    %c0 = arith.constant 0 : index
    %c0_0 = arith.constant 0 : index
    %0 = vector.load %arg2[%c0, %c0_0] : memref<320x128xbf16, #tpu.memory_space<vmem>>, vector<64x128xbf16>
    %c64 = arith.constant 64 : index
    %c0_1 = arith.constant 0 : index
    %1 = vector.load %arg2[%c64, %c0_1] : memref<320x128xbf16, #tpu.memory_space<vmem>>, vector<128x128xbf16>
    %c192 = arith.constant 192 : index
    %c0_2 = arith.constant 0 : index
    %2 = vector.load %arg2[%c192, %c0_2] : memref<320x128xbf16, #tpu.memory_space<vmem>>, vector<128x128xbf16>
    %c0_3 = arith.constant 0 : index
    %c0_4 = arith.constant 0 : index
    %3 = vector.load %arg3[%c0_3, %c0_4] : memref<3x128xf32, #tpu.memory_space<vmem>>, vector<1x128xf32>
    %c1 = arith.constant 1 : index
    %c0_5 = arith.constant 0 : index
    %4 = vector.load %arg3[%c1, %c0_5] : memref<3x128xf32, #tpu.memory_space<vmem>>, vector<1x128xf32>
    %c2 = arith.constant 2 : index
    %c0_6 = arith.constant 0 : index
    %5 = vector.load %arg3[%c2, %c0_6] : memref<3x128xf32, #tpu.memory_space<vmem>>, vector<1x128xf32>
    %c0_7 = arith.constant 0 : index
    %c0_8 = arith.constant 0 : index
    %6 = vector.load %arg1[%c0_7, %c0_8] : memref<32x64xbf16, #tpu.memory_space<vmem>>, vector<32x64xbf16>
    %cst = arith.constant dense<0.000000e+00> : vector<32x128xf32>
    %7 = tpu.matmul %6, %0, %cst {dimension_numbers = #tpu.dot_dimension_numbers<[1], [0], [0], [1], [0, 0, 1, 1], [], []>} : vector<32x64xbf16>, vector<64x128xbf16>, vector<32x128xf32> -> vector<32x128xf32>
    %8 = vector.broadcast %3 : vector<1x128xf32> to vector<32x128xf32>
    %9 = arith.addf %7, %8 : vector<32x128xf32>
    %cst_9 = arith.constant 0.000000e+00 : f32
    %10 = vector.broadcast %cst_9 : f32 to vector<32x128xf32>
    %11 = arith.maximumf %9, %10 : vector<32x128xf32>
    %12 = arith.truncf %11 : vector<32x128xf32> to vector<32x128xbf16>
    %cst_10 = arith.constant dense<0.000000e+00> : vector<32x128xf32>
    %13 = tpu.matmul %12, %1, %cst_10 {dimension_numbers = #tpu.dot_dimension_numbers<[1], [0], [0], [1], [0, 0, 1, 1], [], []>} : vector<32x128xbf16>, vector<128x128xbf16>, vector<32x128xf32> -> vector<32x128xf32>
    %14 = vector.broadcast %4 : vector<1x128xf32> to vector<32x128xf32>
    %15 = arith.addf %13, %14 : vector<32x128xf32>
    %cst_11 = arith.constant 0.000000e+00 : f32
    %16 = vector.broadcast %cst_11 : f32 to vector<32x128xf32>
    %17 = arith.maximumf %15, %16 : vector<32x128xf32>
    %c0_12 = arith.constant 0 : index
    %c0_13 = arith.constant 0 : index
    %18 = vector.load %arg4[%c0_12, %c0_13] : memref<32x128xf32, #tpu.memory_space<vmem>>, vector<32x128xf32>
    tpu.vector_store %arg4[%c0_12, %c0_13], %17 {strides = array<i32>} : memref<32x128xf32, #tpu.memory_space<vmem>>, vector<32x128xf32>,
    %19 = arith.truncf %17 : vector<32x128xf32> to vector<32x128xbf16>
    %cst_14 = arith.constant dense<0.000000e+00> : vector<32x128xf32>
    %20 = tpu.matmul %19, %2, %cst_14 {dimension_numbers = #tpu.dot_dimension_numbers<[1], [0], [0], [1], [0, 0, 1, 1], [], []>} : vector<32x128xbf16>, vector<128x128xbf16>, vector<32x128xf32> -> vector<32x128xf32>
    %21 = vector.broadcast %5 : vector<1x128xf32> to vector<32x128xf32>
    %22 = arith.addf %20, %21 : vector<32x128xf32>
    %c0_15 = arith.constant 0 : index
    %c0_16 = arith.constant 0 : index
    %23 = vector.load %arg5[%c0_15, %c0_16] : memref<32x128xf32, #tpu.memory_space<vmem>>, vector<32x128xf32>
    tpu.vector_store %arg5[%c0_15, %c0_16], %22 {strides = array<i32>} : memref<32x128xf32, #tpu.memory_space<vmem>>, vector<32x128xf32>,
    return
  }
  func.func @transform_0(%arg0: i32) -> (i32, i32) {
    %c0_i32 = arith.constant 0 : i32
    %c0_i32_0 = arith.constant 0 : i32
    %c0_i32_1 = arith.constant 0 : i32
    return %c0_i32, %c0_i32_0 : i32, i32
  }
  func.func @transform_1(%arg0: i32) -> (i32, i32) {
    %c0_i32 = arith.constant 0 : i32
    %c0_i32_0 = arith.constant 0 : i32
    %c0_i32_1 = arith.constant 0 : i32
    return %c0_i32, %c0_i32_0 : i32, i32
  }
  func.func @transform_2(%arg0: i32) -> (i32, i32) {
    %c0_i32 = arith.constant 0 : i32
    %c0_i32_0 = arith.constant 0 : i32
    %c0_i32_1 = arith.constant 0 : i32
    return %c0_i32, %c0_i32_0 : i32, i32
  }
  func.func @transform_3(%arg0: i32) -> (i32, i32) {
    %c0_i32 = arith.constant 0 : i32
    %c0_i32_0 = arith.constant 0 : i32
    %c0_i32_1 = arith.constant 0 : i32
    return %c0_i32, %c0_i32_0 : i32, i32
  }
  func.func @transform_4(%arg0: i32) -> (i32, i32) {
    %c0_i32 = arith.constant 0 : i32
    %c0_i32_0 = arith.constant 0 : i32
    %c0_i32_1 = arith.constant 0 : i32
    return %c0_i32, %c0_i32_0 : i32, i32
  }
}

</mosaic_0001>

<llo_original>
// kernel: tpu_custom_call.1
$region0: #{tpu_custom_call.1}
  #allocation0 [shape = 'u32[]', space=smem, size = 0x4, offset = 0x4, fixed_abs, tag = 'smem constant byte address 0x4 - core index']
  #allocation1 [shape = 'u32[72,128]{1,0:T(1,128)}', space=vmem, size = 0x9000, scoped, tag = 'internal scratch']
  %s0 = inlined_call_operand.hbm [shape: bf16[32,64], index: 0, kind: input, shape index: {}]
  %s1 = inlined_call_operand.hbm [shape: bf16[320,128], index: 1, kind: input, shape index: {}]
  %s2 = inlined_call_operand.hbm [shape: f32[3,128], index: 2, kind: input, shape index: {}]
  %s3 = inlined_call_operand.hbm [shape: f32[32,128], index: 3, kind: output, shape index: {0}]
  %s4 = inlined_call_operand.hbm [shape: f32[32,128], index: 4, kind: output, shape index: {1}]
  %5 = xla_tuple %s3, %s4
  %s6 = sld [smem:[#allocation0]]
  $region42: #{tpu_custom_call.1} parent=0
    _
  %s8 = ssub.s32 1, %s6
  %s9 = scalar_select 0, %s8, %s6
  $region1: #{tpu_custom_call.1} parent=0
    #allocation2 [shape = 'u8[8192]{0}', space=vmem, size = 0x2000, scoped, tag = 'input window, operand 0, single buffered']
    #allocation3 [shape = 's32[1]{0}', space=sflag, size = 0x4, scoped, tag = 'scoped memory for tpu_custom_call.1']
    #allocation4 [shape = 's32[1]{0}', space=sflag, size = 0x4, scoped, tag = 'scoped memory for tpu_custom_call.1']
    #allocation5 [shape = 'u8[81920]{0}', space=vmem, size = 0x14000, scoped, tag = 'input window, operand 1, single buffered']
    #allocation6 [shape = 's32[1]{0}', space=sflag, size = 0x4, scoped, tag = 'scoped memory for tpu_custom_call.1']
    #allocation7 [shape = 'u8[2048]{0}', space=vmem, size = 0x800, scoped, tag = 'input window, operand 2, single buffered']
    #allocation8 [shape = 'u8[16384]{0}', space=vmem, size = 0x4000, scoped, tag = 'output window, operand 0, single buffered']
    #allocation9 [shape = 'u8[16384]{0}', space=vmem, size = 0x4000, scoped, tag = 'output window, operand 1, single buffered']
    #allocation10 [shape = 's32[1]{0}', space=sflag, size = 0x4, scoped, tag = 'scoped memory for tpu_custom_call.1']
    %10 = vsyncpa [#allocation3], 0
    %11 = vsyncpa [#allocation6], 0
    %12 = vsyncpa [#allocation4], 0
    %13 = vsyncpa [#allocation10], 0
    // Predicated region
    $region2: #{tpu_custom_call.1} parent=1 // pred_check
      _
    $region3: #{tpu_custom_call.1} parent=1 // pred_check_branch
      %15 = sbr.rel (0) target = $region5
    $region4: #{tpu_custom_call.1} parent=1 // pred_region
      %17 = vsyncadd [#allocation3], 0
      %s18 = sshll.u32 %s0, 4
      %s19 = int_to_ptr.hbm [resolvable:$true] %s18
      %s20 = sshll.u32 [#allocation2], 4
      %s21 = int_to_ptr.vmem [resolvable:$true] %s20
      %26 = dma.hbm_to_vmem [thread:$0]  %s19, 256, %s21, [#allocation3], 64, 64, 4
    $region5: #{tpu_custom_call.1} parent=1 // pred_fallthru
      _
    // Predicated region
    $region6: #{tpu_custom_call.1} parent=1 // pred_check
      _
    $region7: #{tpu_custom_call.1} parent=1 // pred_check_branch
      %28 = sbr.rel (0) target = $region9
    $region8: #{tpu_custom_call.1} parent=1 // pred_region
      %30 = vsyncadd [#allocation6], 0
      %s31 = sshll.u32 %s1, 4
      %s32 = int_to_ptr.hbm [resolvable:$true] %s31
      %s33 = sshll.u32 [#allocation5], 4
      %s34 = int_to_ptr.vmem [resolvable:$true] %s33
      %39 = dma.hbm_to_vmem [thread:$0]  %s32, 2560, %s34, [#allocation6], 64, 64, 4
    $region9: #{tpu_custom_call.1} parent=1 // pred_fallthru
      _
    // Predicated region
    $region10: #{tpu_custom_call.1} parent=1 // pred_check
      _
    $region11: #{tpu_custom_call.1} parent=1 // pred_check_branch
      %41 = sbr.rel (0) target = $region13
    $region12: #{tpu_custom_call.1} parent=1 // pred_region
      %43 = vsyncadd [#allocation6], 0
      %s45 = sshll.u32 %s2, 4
      %s46 = int_to_ptr.hbm [resolvable:$true] %s45
      %s47 = sshll.u32 [#allocation7], 4
      %s48 = int_to_ptr.vmem [resolvable:$true] %s47
      %50 = dma.hbm_to_vmem [thread:$0]  %s46, 64, %s48, [#allocation6]
    $region13: #{tpu_custom_call.1} parent=1 // pred_fallthru
      _
    // Predicated region
    $region14: #{tpu_custom_call.1} parent=1 // pred_check
      _
    $region15: #{tpu_custom_call.1} parent=1 // pred_check_branch
      %52 = sbr.rel (0) target = $region17
    $region16: #{tpu_custom_call.1} parent=1 // pred_region
      %54 = dma.done [#allocation3], 256
    $region17: #{tpu_custom_call.1} parent=1 // pred_fallthru
      _
    // Predicated region
    $region18: #{tpu_custom_call.1} parent=1 // pred_check
      _
    $region19: #{tpu_custom_call.1} parent=1 // pred_check_branch
      %56 = sbr.rel (0) target = $region21
    $region20: #{tpu_custom_call.1} parent=1 // pred_region
      %58 = dma.done [#allocation6], 2560
    $region21: #{tpu_custom_call.1} parent=1 // pred_fallthru
      _
    // Predicated region
    $region22: #{tpu_custom_call.1} parent=1 // pred_check
      _
    $region23: #{tpu_custom_call.1} parent=1 // pred_check_branch
      %60 = sbr.rel (0) target = $region25
    $region24: #{tpu_custom_call.1} parent=1 // pred_region
      %62 = dma.done [#allocation6], 64
    $region25: #{tpu_custom_call.1} parent=1 // pred_fallthru
      _
    %v64 = vld [vmem:[#allocation5] sm:$0xf]
    %v65 = vld [vmem:[#allocation5 + $0x4] sm:$0xf]
    %v66 = vld [vmem:[#allocation5 + $0x8] sm:$0xf]
    %v67 = vld [vmem:[#allocation5 + $0xc] sm:$0xf]
    %v68 = vld [vmem:[#allocation5 + $0x10] sm:$0xf]
    %v69 = vld [vmem:[#allocation5 + $0x14] sm:$0xf]
    %v70 = vld [vmem:[#allocation5 + $0x18] sm:$0xf]
    %v71 = vld [vmem:[#allocation5 + $0x1c] sm:$0xf]
    %v72 = vld [vmem:[#allocation5 + $0x20] sm:$0xf]
    %v73 = vld [vmem:[#allocation5 + $0x24] sm:$0xf]
    %v74 = vld [vmem:[#allocation5 + $0x28] sm:$0xf]
    %v75 = vld [vmem:[#allocation5 + $0x2c] sm:$0xf]
    %v76 = vld [vmem:[#allocation5 + $0x30] sm:$0xf]
    %v77 = vld [vmem:[#allocation5 + $0x34] sm:$0xf]
    %v78 = vld [vmem:[#allocation5 + $0x38] sm:$0xf]
    %v79 = vld [vmem:[#allocation5 + $0x3c] sm:$0xf]
    %v80 = vld [vmem:[#allocation5 + $0x40] sm:$0xf]
    %v81 = vld [vmem:[#allocation5 + $0x44] sm:$0xf]
    %v82 = vld [vmem:[#allocation5 + $0x48] sm:$0xf]
    %v83 = vld [vmem:[#allocation5 + $0x4c] sm:$0xf]
    %v84 = vld [vmem:[#allocation5 + $0x50] sm:$0xf]
    %v85 = vld [vmem:[#allocation5 + $0x54] sm:$0xf]
    %v86 = vld [vmem:[#allocation5 + $0x58] sm:$0xf]
    %v87 = vld [vmem:[#allocation5 + $0x5c] sm:$0xf]
    %v88 = vld [vmem:[#allocation5 + $0x60] sm:$0xf]
    %v89 = vld [vmem:[#allocation5 + $0x64] sm:$0xf]
    %v90 = vld [vmem:[#allocation5 + $0x68] sm:$0xf]
    %v91 = vld [vmem:[#allocation5 + $0x6c] sm:$0xf]
    %v92 = vld [vmem:[#allocation5 + $0x70] sm:$0xf]
    %v93 = vld [vmem:[#allocation5 + $0x74] sm:$0xf]
    %v94 = vld [vmem:[#allocation5 + $0x78] sm:$0xf]
    %v95 = vld [vmem:[#allocation5 + $0x7c] sm:$0xf]
    %v96 = vld [vmem:[#allocation5 + $0x80] sm:$0xf]
    %v97 = vld [vmem:[#allocation5 + $0x84] sm:$0xf]
    %v98 = vld [vmem:[#allocation5 + $0x88] sm:$0xf]
    %v99 = vld [vmem:[#allocation5 + $0x8c] sm:$0xf]
    %v100 = vld [vmem:[#allocation5 + $0x90] sm:$0xf]
    %v101 = vld [vmem:[#allocation5 + $0x94] sm:$0xf]
    %v102 = vld [vmem:[#allocation5 + $0x98] sm:$0xf]
    %v103 = vld [vmem:[#allocation5 + $0x9c] sm:$0xf]
    %v104 = vld [vmem:[#allocation7] sm:$0x1]
    %v105 = vld [vmem:[#allocation7 + $0x1] sm:$0x1]
    %v106 = vld [vmem:[#allocation7 + $0x2] sm:$0x1]
    %v107 = vld [vmem:[#allocation2] sm:$0xf]
    %v108 = vld [vmem:[#allocation2 + $0x4] sm:$0xf]
    %v109 = vld [vmem:[#allocation2 + $0x8] sm:$0xf]
    %v110 = vld [vmem:[#allocation2 + $0xc] sm:$0xf]
    %v111 = vperm.slane %v104, 0
    %v116 = vunpack.c.l.b16 %v107
    %v117 = vunpack.c.l.b16 %v108
    %v118 = vunpack.c.l.b16 %v109
    %v119 = vunpack.c.l.b16 %v110
    %v120 = vpack.c.b16 %v117, %v116
    %v121 = vpack.c.b16 %v119, %v118
    %v130 = vunpack.c.l.b16 %v64
    %v131 = vunpack.c.l.b16 %v65
    %v132 = vunpack.c.l.b16 %v66
    %v133 = vunpack.c.l.b16 %v67
    %v134 = vunpack.c.l.b16 %v68
    %v135 = vunpack.c.l.b16 %v69
    %v136 = vunpack.c.l.b16 %v70
    %v137 = vunpack.c.l.b16 %v71
    %v138 = vpack.c.b16 %v131, %v130
    %v139 = vpack.c.b16 %v133, %v132
    %v140 = vpack.c.b16 %v135, %v134
    %v141 = vpack.c.b16 %v137, %v136
    %vm146 = vcmask 523264
    %v148 = vsel %vm146, %v120, 0
    %v151 = vsel %vm146, %v121, 0
    %153 = vmatpush.bf16.msra.mxu0 0
    %154 = vmatpush.bf16.msra.mxu0 0
    %155 = vmatpush.bf16.msra.mxu0 0
    %156 = vmatpush.bf16.msra.mxu0 0
    %157 = vmatpush.bf16.msra.mxu0 %v141
    %158 = vmatpush.bf16.msra.mxu0 %v140
    %159 = vmatpush.bf16.msra.mxu0 %v139
    %160 = vmatpush.bf16.msra.mxu0 %v138
    %161 = vmatmul.bf16.gmra.mxu0 %v148
    %v162 = vpop.f32.mrf.mxu0
    %v163 = vadd.f32 %v111, %v162
    %v164 = vpop.f32.mrf.mxu0
    %v165 = vadd.f32 %v111, %v164
    %166 = vmatmul.bf16.gmra.mxu0 %v151
    %v167 = vpop.f32.mrf.mxu0
    %v168 = vadd.f32 %v111, %v167
    %v169 = vpop.f32.mrf.mxu0
    %v170 = vadd.f32 %v111, %v169
    %171 = vdwg.mxu0
    %v172 = vmax.f32 %v163, 0.0
    %v173 = vmax.f32 %v165, 0.0
    %v174 = vmax.f32 %v168, 0.0
    %v175 = vmax.f32 %v170, 0.0
    %v176 = vpack.c.bf16 %v173, %v172
    %v177 = vpack.c.bf16 %v175, %v174
    %v178 = vperm.slane %v105, 0
    %v195 = vunpack.c.l.b16 %v72
    %v196 = vunpack.c.l.b16 %v73
    %v197 = vunpack.c.l.b16 %v74
    %v198 = vunpack.c.l.b16 %v75
    %v199 = vunpack.c.l.b16 %v76
    %v200 = vunpack.c.l.b16 %v77
    %v201 = vunpack.c.l.b16 %v78
    %v202 = vunpack.c.l.b16 %v79
    %v203 = vunpack.c.l.b16 %v80
    %v204 = vunpack.c.l.b16 %v81
    %v205 = vunpack.c.l.b16 %v82
    %v206 = vunpack.c.l.b16 %v83
    %v207 = vunpack.c.l.b16 %v84
    %v208 = vunpack.c.l.b16 %v85
    %v209 = vunpack.c.l.b16 %v86
    %v210 = vunpack.c.l.b16 %v87
    %v211 = vpack.c.b16 %v196, %v195
    %v212 = vpack.c.b16 %v198, %v197
    %v213 = vpack.c.b16 %v200, %v199
    %v214 = vpack.c.b16 %v202, %v201
    %v215 = vpack.c.b16 %v204, %v203
    %v216 = vpack.c.b16 %v206, %v205
    %v217 = vpack.c.b16 %v208, %v207
    %v218 = vpack.c.b16 %v210, %v209
    %227 = vmatpush.bf16.msra.mxu0 %v218
    %228 = vmatpush.bf16.msra.mxu0 %v217
    %229 = vmatpush.bf16.msra.mxu0 %v216
    %230 = vmatpush.bf16.msra.mxu0 %v215
    %231 = vmatpush.bf16.msra.mxu0 %v214
    %232 = vmatpush.bf16.msra.mxu0 %v213
    %233 = vmatpush.bf16.msra.mxu0 %v212
    %234 = vmatpush.bf16.msra.mxu0 %v211
    %235 = vmatmul.bf16.gmra.mxu0 %v176
    %v236 = vpop.f32.mrf.mxu0
    %v237 = vadd.f32 %v178, %v236
    %v238 = vpop.f32.mrf.mxu0
    %v239 = vadd.f32 %v178, %v238
    %240 = vmatmul.bf16.gmra.mxu0 %v177
    %v241 = vpop.f32.mrf.mxu0
    %v242 = vadd.f32 %v178, %v241
    %v243 = vpop.f32.mrf.mxu0
    %v244 = vadd.f32 %v178, %v243
    %245 = vdwg.mxu0
    %v246 = vmax.f32 %v237, 0.0
    %v247 = vmax.f32 %v239, 0.0
    %v248 = vmax.f32 %v242, 0.0
    %v249 = vmax.f32 %v244, 0.0
    %250 = vst [vmem:[#allocation8] sm:$0xff] %v246
    %251 = vst [vmem:[#allocation8 + $0x8] sm:$0xff] %v247
    %252 = vst [vmem:[#allocation8 + $0x10] sm:$0xff] %v248
    %253 = vst [vmem:[#allocation8 + $0x18] sm:$0xff] %v249
    %v254 = vpack.c.bf16 %v247, %v246
    %v255 = vpack.c.bf16 %v249, %v248
    %v256 = vperm.slane %v106, 0
    %v273 = vunpack.c.l.b16 %v88
    %v274 = vunpack.c.l.b16 %v89
    %v275 = vunpack.c.l.b16 %v90
    %v276 = vunpack.c.l.b16 %v91
    %v277 = vunpack.c.l.b16 %v92
    %v278 = vunpack.c.l.b16 %v93
    %v279 = vunpack.c.l.b16 %v94
    %v280 = vunpack.c.l.b16 %v95
    %v281 = vunpack.c.l.b16 %v96
    %v282 = vunpack.c.l.b16 %v97
    %v283 = vunpack.c.l.b16 %v98
    %v284 = vunpack.c.l.b16 %v99
    %v285 = vunpack.c.l.b16 %v100
    %v286 = vunpack.c.l.b16 %v101
    %v287 = vunpack.c.l.b16 %v102
    %v288 = vunpack.c.l.b16 %v103
    %v289 = vpack.c.b16 %v274, %v273
    %v290 = vpack.c.b16 %v276, %v275
    %v291 = vpack.c.b16 %v278, %v277
    %v292 = vpack.c.b16 %v280, %v279
    %v293 = vpack.c.b16 %v282, %v281
    %v294 = vpack.c.b16 %v284, %v283
    %v295 = vpack.c.b16 %v286, %v285
    %v296 = vpack.c.b16 %v288, %v287
    %305 = vmatpush.bf16.msra.mxu0 %v296
    %306 = vmatpush.bf16.msra.mxu0 %v295
    %307 = vmatpush.bf16.msra.mxu0 %v294
    %308 = vmatpush.bf16.msra.mxu0 %v293
    %309 = vmatpush.bf16.msra.mxu0 %v292
    %310 = vmatpush.bf16.msra.mxu0 %v291
    %311 = vmatpush.bf16.msra.mxu0 %v290
    %312 = vmatpush.bf16.msra.mxu0 %v289
    %313 = vmatmul.bf16.gmra.mxu0 %v254
    %v314 = vpop.f32.mrf.mxu0
    %v315 = vadd.f32 %v256, %v314
    %v316 = vpop.f32.mrf.mxu0
    %v317 = vadd.f32 %v256, %v316
    %318 = vmatmul.bf16.gmra.mxu0 %v255
    %v319 = vpop.f32.mrf.mxu0
    %v320 = vadd.f32 %v256, %v319
    %v321 = vpop.f32.mrf.mxu0
    %v322 = vadd.f32 %v256, %v321
    %323 = vdwg.mxu0
    %324 = vst [vmem:[#allocation9] sm:$0xff] %v315
    %325 = vst [vmem:[#allocation9 + $0x8] sm:$0xff] %v317
    %326 = vst [vmem:[#allocation9 + $0x10] sm:$0xff] %v320
    %327 = vst [vmem:[#allocation9 + $0x18] sm:$0xff] %v322
    // Predicated region
    $region26: #{tpu_custom_call.1} parent=1 // pred_check
      _
    $region27: #{tpu_custom_call.1} parent=1 // pred_check_branch
      %329 = sbr.rel (0) target = $region29
    $region28: #{tpu_custom_call.1} parent=1 // pred_region
      %331 = vsyncadd [#allocation4], 0
      %s332 = sshll.u32 [#allocation8], 4
      %s333 = int_to_ptr.vmem [resolvable:$true] %s332
      %s334 = sshll.u32 %s3, 4
      %s335 = int_to_ptr.hbm [resolvable:$true] %s334
      %340 = dma.vmem_to_hbm [thread:$0]  %s333, 512, %s335, [#allocation4], 128, 128, 8
    $region29: #{tpu_custom_call.1} parent=1 // pred_fallthru
      _
    // Predicated region
    $region30: #{tpu_custom_call.1} parent=1 // pred_check
      _
    $region31: #{tpu_custom_call.1} parent=1 // pred_check_branch
      %342 = sbr.rel (0) target = $region33
    $region32: #{tpu_custom_call.1} parent=1 // pred_region
      %344 = vsyncadd [#allocation10], 0
      %s345 = sshll.u32 [#allocation9], 4
      %s346 = int_to_ptr.vmem [resolvable:$true] %s345
      %s347 = sshll.u32 %s4, 4
      %s348 = int_to_ptr.hbm [resolvable:$true] %s347
      %353 = dma.vmem_to_hbm [thread:$0]  %s346, 512, %s348, [#allocation10], 128, 128, 8
    $region33: #{tpu_custom_call.1} parent=1 // pred_fallthru
      _
    // Predicated region
    $region34: #{tpu_custom_call.1} parent=1 // pred_check
      _
    $region35: #{tpu_custom_call.1} parent=1 // pred_check_branch
      %355 = sbr.rel (0) target = $region37
    $region36: #{tpu_custom_call.1} parent=1 // pred_region
      %357 = dma.done [#allocation4], 512
    $region37: #{tpu_custom_call.1} parent=1 // pred_fallthru
      _
    // Predicated region
    $region38: #{tpu_custom_call.1} parent=1 // pred_check
      _
    $region39: #{tpu_custom_call.1} parent=1 // pred_check_branch
      %359 = sbr.rel (0) target = $region41
    $region40: #{tpu_custom_call.1} parent=1 // pred_region
      %361 = dma.done [#allocation10], 512
    $region41: #{tpu_custom_call.1} parent=1 // pred_fallthru
      _
    %362 = vsyncpa [#allocation3], 1
    %363 = vsyncpa [#allocation6], 1
    %364 = vsyncpa [#allocation4], 1
    %365 = vsyncpa [#allocation10], 1

</llo_original>
